<compile_context>
chip_gen: v5e
topology: v5e:2x2
jax: 0.10.0
libtpu: 0.0.40
codegen_flags: <defaults>
</compile_context>

<pallas_src>
import jax
import jax.numpy as jnp
from jax import lax
from jax.experimental import pallas as pl
from jax.experimental.pallas import tpu as pltpu

# ----------------------------- model sizes (logical) -----------------------
T = 16           # time frames per clip
F_FEAT = 64      # pooled CNN feature width (stand-in for the Cnn14 feature dim)
D_IN = 32        # d_in  (embedding width fed to Projection)
D_OUT = 32       # d_out (projection width)
N_CLASSES = 16   # classes_num
LN_EPS = 1e-5

# ----------------------------- kernel-facing padded sizes ------------------
PAD = 128                     # lane width of each matmul output block
W_COLS = 2 * PAD              # packed weight buffer is 256 lanes wide

# packed (bf16) matmul-weight row layout; every offset/extent is a multiple of
# 16 so bf16 sublane packing never needs a repack:
_FC1_OFF = 0                  # fc1 weight   rows [0,   64)  lanes [0, 128)
_CP1_OFF = F_FEAT             # [cls | p1]   rows [64,  192) lanes [0, 256)
_P2_OFF = _CP1_OFF + PAD      # proj linear2 rows [192, 320) lanes [0, 128)
W_ROWS = _P2_OFF + PAD        # 320 rows total


def _gelu_exact(x):
    # matches torch.nn.functional.gelu default (erf form), computed in f32
    return 0.5 * x * (1.0 + lax.erf(x * (1.0 / jnp.sqrt(2.0).astype(x.dtype))))


def audio_encoder_kernel(x_ref, w_ref, v_ref, out_ref):
    """One batch tile.

    x_ref:   (b_tile*T, F_FEAT) bf16  frame features (clip-major rows: b*T + t)
    w_ref:   (W_ROWS, W_COLS)   bf16  packed matmul weights (single DMA)
    v_ref:   (8, PAD)           f32   bias / LayerNorm affine rows
    out_ref: (b_tile, 2*PAD)    f32   [:, :PAD] = projection, [:, PAD:] = clipwise
    """
    b_tile = x_ref.shape[0] // T

    # ---- temporal mean pooling BEFORE fc1 (mean commutes with the linear) --
    # layout-preserving reshape (split of the sublane dim at a multiple of the
    # sublane pack) + sum over the middle axis runs on the XLU, not the MXU.
    xf = x_ref[...].astype(jnp.float32)                       # (b_tile*T, F)
    pooled = jnp.sum(xf.reshape(b_tile, T, F_FEAT), axis=1) * (1.0 / T)
    pooled = pooled.astype(jnp.bfloat16)                      # MXU operand

    # ---- unpack parameters (static, aligned slices) ------------------------
    fc1_w = w_ref[_FC1_OFF:_FC1_OFF + F_FEAT, 0:PAD]          # (64, 128) bf16
    cp_w = w_ref[_CP1_OFF:_CP1_OFF + PAD, :]                  # (128, 256) bf16
    p2_w = w_ref[_P2_OFF:_P2_OFF + PAD, 0:PAD]                # (128, 128) bf16
    fc1_b = v_ref[0:1, :]                                     # f32 rows
    cls_b = v_ref[1:2, :]
    ln_g = v_ref[2:3, :]
    ln_b = v_ref[3:4, :]

    # ---- base head: fc1 + relu (bf16 MXU, f32 accumulate) ------------------
    h = jnp.dot(pooled, fc1_w, preferred_element_type=jnp.float32)  # (bt, 128)
    emb = jnp.maximum(h + fc1_b, 0.0)                         # padded lanes = 0

    # ---- fused [classifier | projection-linear1]: one 256-wide MXU op ------
    cp = jnp.dot(emb.astype(jnp.bfloat16), cp_w,
                 preferred_element_type=jnp.float32)          # (bt, 256)
    logits = cp[:, 0:PAD] + cls_b
    clip = jax.nn.sigmoid(logits)                             # f32 EUP
    e1 = cp[:, PAD:2 * PAD]                                   # padded lanes = 0

    # ---- Projection: gelu -> linear2 -> (eval dropout) -> LayerNorm --------
    g = _gelu_exact(e1)                                       # f32
    e2 = jnp.dot(g.astype(jnp.bfloat16), p2_w,
                 preferred_element_type=jnp.float32)          # (bt, 128)
    s = e1 + e2                                               # padded lanes = 0

    # LayerNorm over the D_OUT logical lanes only; padded lanes of s are zero,
    # so sum(s)/D and E[s^2] - mu^2 need no lane mask (biased var, like torch).
    mu = jnp.sum(s, axis=-1, keepdims=True) * (1.0 / D_OUT)
    ms = jnp.sum(s * s, axis=-1, keepdims=True) * (1.0 / D_OUT)
    var = ms - mu * mu
    proj = (s - mu) * lax.rsqrt(var + LN_EPS) * ln_g + ln_b   # padded lanes = 0

    # ---- fused, lane-dense output (unmasked 256-lane stores) ---------------
    out_ref[:, 0:PAD] = proj
    out_ref[:, PAD:2 * PAD] = clip


def pack_weights(params):
    """Pack the 4 matmul weights into one bf16 (W_ROWS, W_COLS) buffer."""
    fc1_w, _, cls_w, _, p1_w, p2_w, _, _ = params
    w = jnp.zeros((W_ROWS, W_COLS), jnp.float32)
    w = w.at[_FC1_OFF:_FC1_OFF + F_FEAT, 0:D_IN].set(fc1_w)
    w = w.at[_CP1_OFF:_CP1_OFF + D_IN, 0:N_CLASSES].set(cls_w)       # cls | p1
    w = w.at[_CP1_OFF:_CP1_OFF + D_IN, PAD:PAD + D_OUT].set(p1_w)    # fused
    w = w.at[_P2_OFF:_P2_OFF + D_OUT, 0:D_OUT].set(p2_w)
    return w.astype(jnp.bfloat16)


def pack_vectors(params):
    """Pack bias / LayerNorm-affine rows into one f32 (8, PAD) buffer."""
    _, fc1_b, _, cls_b, _, _, ln_g, ln_b = params
    v = jnp.zeros((8, PAD), jnp.float32)
    v = v.at[0, 0:D_IN].set(fc1_b.reshape(-1))
    v = v.at[1, 0:N_CLASSES].set(cls_b.reshape(-1))
    v = v.at[2, 0:D_OUT].set(ln_g.reshape(-1))
    v = v.at[3, 0:D_OUT].set(ln_b.reshape(-1))
    return v


def _pick_b_tile(b):
    """>=8 rows (full f32 sublane); fill MXU rows on large batches, but keep
    >=2 grid steps where possible so v7x's second TensorCore gets work."""
    if b <= 8:
        return 8
    bt = min(128, (b // 2 // 8) * 8)
    return max(8, bt)


@jax.jit
def audio_encoder_forward(x, w_packed, v_packed):
    """Returns (projected_vec, clipwise_output), like AudioEncoder.forward."""
    b, t, f = x.shape
    assert t == T and f == F_FEAT
    b_tile = _pick_b_tile(b)
    nb = pl.cdiv(b, b_tile)
    b_pad = nb * b_tile

    # pad only the batch dimension (no lane padding of x), flatten time into
    # the row dim (clip-major: row = b*T + t), and cast the MXU operand to bf16.
    xb = x
    if b_pad != b:
        xb = jnp.zeros((b_pad, T, F_FEAT), x.dtype).at[:b].set(x)
    x2d = xb.reshape(b_pad * T, F_FEAT).astype(jnp.bfloat16)

    # ---- cost estimate / VMEM budget derived from actual block sizes -------
    flops_blk = (
        2 * b_tile * F_FEAT * PAD          # fc1 (after pooling)
        + 2 * b_tile * PAD * W_COLS        # fused classifier | proj-linear1
        + 2 * b_tile * PAD * PAD           # proj-linear2
        + b_tile * T * F_FEAT              # temporal pooling adds
    )
    transc_blk = 2 * b_tile * PAD          # erf + sigmoid lanes
    x_blk = b_tile * T * F_FEAT * 2        # bf16
    w_blk = W_ROWS * W_COLS * 2            # bf16
    v_blk = 8 * PAD * 4                    # f32
    o_blk = b_tile * 2 * PAD * 4           # f32
    bytes_blk = x_blk + w_blk + v_blk + o_blk
    # double-buffered blocks + generous headroom for in-kernel intermediates,
    # capped well below v7x's 64 MiB physical VMEM.
    vmem_limit = min(64 * 1024 * 1024, max(4 * 1024 * 1024, 4 * 2 * bytes_blk))

    out = pl.pallas_call(
        audio_encoder_kernel,
        out_shape=jax.ShapeDtypeStruct((b_pad, 2 * PAD), jnp.float32),
        grid=(nb,),
        in_specs=[
            pl.BlockSpec((b_tile * T, F_FEAT), lambda i: (i, 0)),
            pl.BlockSpec((W_ROWS, W_COLS), lambda i: (0, 0)),   # resident weights
            pl.BlockSpec((8, PAD), lambda i: (0, 0)),           # resident vectors
        ],
        out_specs=pl.BlockSpec((b_tile, 2 * PAD), lambda i: (i, 0)),
        compiler_params=pltpu.CompilerParams(
            dimension_semantics=("parallel",),       # v7x: spread batch tiles
            vmem_limit_bytes=int(vmem_limit),
        ),
        cost_estimate=pl.CostEstimate(
            flops=int(nb * flops_blk),
            transcendentals=int(nb * transc_blk),
            bytes_accessed=int(nb * bytes_blk),
        ),
    )(x2d, w_packed, v_packed)

    proj = out[:b, :D_OUT]
    clip = out[:b, PAD:PAD + N_CLASSES]
    return proj, clip


def init_params(key):
    """Deterministic parameter init (shapes from the module's __init__)."""
    ks = jax.random.split(key, 8)
    scale = 0.1
    # nn.Linear weights are (out, in); stored transposed as (in, out).
    fc1_w = scale * jax.random.normal(ks[0], (F_FEAT, D_IN), jnp.float32)
    fc1_b = scale * jax.random.normal(ks[1], (D_IN,), jnp.float32)
    cls_w = scale * jax.random.normal(ks[2], (D_IN, N_CLASSES), jnp.float32)
    cls_b = scale * jax.random.normal(ks[3], (N_CLASSES,), jnp.float32)
    p1_w = scale * jax.random.normal(ks[4], (D_IN, D_OUT), jnp.float32)
    p2_w = scale * jax.random.normal(ks[5], (D_OUT, D_OUT), jnp.float32)
    ln_g = 1.0 + 0.1 * jax.random.normal(ks[6], (D_OUT,), jnp.float32)
    ln_b = 0.1 * jax.random.normal(ks[7], (D_OUT,), jnp.float32)
    return (fc1_w, fc1_b, cls_w, cls_b, p1_w, p2_w, ln_g, ln_b)


def reference_forward(x, params):
    """Pure-JAX f32 reference (logical shapes) for a correctness check."""
    fc1_w, fc1_b, cls_w, cls_b, p1_w, p2_w, ln_g, ln_b = params
    pooled = jnp.mean(x, axis=1)
    emb = jnp.maximum(pooled @ fc1_w + fc1_b, 0.0)
    clip = jax.nn.sigmoid(emb @ cls_w + cls_b)
    e1 = emb @ p1_w
    e2 = jax.nn.gelu(e1, approximate=False) @ p2_w
    s = e1 + e2
    mu = jnp.mean(s, axis=-1, keepdims=True)
    var = jnp.mean((s - mu) ** 2, axis=-1, keepdims=True)
    proj = (s - mu) / jnp.sqrt(var + LN_EPS) * ln_g + ln_b
    return proj, clip


if __name__ == "__main__":
    B = 16  # small demo batch; 2 batch tiles -> both v7x TensorCores get work
    key = jax.random.PRNGKey(0)
    k_x, k_p = jax.random.split(key)
    x = jax.random.normal(k_x, (B, T, F_FEAT), jnp.float32)
    params = init_params(k_p)
    w_packed = pack_weights(params)
    v_packed = pack_vectors(params)

    proj_vec, clipwise = audio_encoder_forward(x, w_packed, v_packed)
    jax.block_until_ready((proj_vec, clipwise))

    ref_proj, ref_clip = reference_forward(x, params)
    assert proj_vec.shape == (B, D_OUT)
    assert clipwise.shape == (B, N_CLASSES)
    # tolerances are loose because the kernel runs bf16 MXU operands against
    # an f32 reference (f32 accumulation; all elementwise math stays f32).
    assert jnp.allclose(proj_vec, ref_proj, atol=1e-1, rtol=1e-1)
    assert jnp.allclose(clipwise, ref_clip, atol=2e-2, rtol=2e-2)

    print("KERNEL_OK")
</pallas_src>

<mosaic_0001>
module attributes {stable_mosaic.version = 11 : i64} {
  func.func @audio_encoder_kernel(%arg0: i32, %arg1: memref<128x64xbf16, #tpu.memory_space<vmem>>, %arg2: memref<320x256xbf16, #tpu.memory_space<vmem>>, %arg3: memref<8x128xf32, #tpu.memory_space<vmem>>, %arg4: memref<8x256xf32, #tpu.memory_space<vmem>>) attributes {dimension_semantics = [#tpu.dimension_semantics<parallel>], iteration_bounds = array<i64: 2>, scalar_prefetch = 0 : i64, scratch_operands = 0 : i64, tpu.core_type = #tpu.core_type<tc>, window_params = [{transform_indices = @transform_0, window_bounds = array<i64: 128, 64>}, {pipeline_mode = #tpu.pipeline_mode<synchronous>, transform_indices = @transform_1, window_bounds = array<i64: 320, 256>}, {pipeline_mode = #tpu.pipeline_mode<synchronous>, transform_indices = @transform_2, window_bounds = array<i64: 8, 128>}, {transform_indices = @transform_3, window_bounds = array<i64: 8, 256>}]} {
    %c0 = arith.constant 0 : index
    %c0_0 = arith.constant 0 : index
    %0 = vector.load %arg1[%c0, %c0_0] : memref<128x64xbf16, #tpu.memory_space<vmem>>, vector<128x64xbf16>
    %1 = arith.extf %0 : vector<128x64xbf16> to vector<128x64xf32>
    %2 = vector.shape_cast %1 : vector<128x64xf32> to vector<8x16x64xf32>
    %cst = arith.constant dense<0.000000e+00> : vector<8x64xf32>
    %3 = vector.multi_reduction <add>, %2, %cst [1] : vector<8x16x64xf32> to vector<8x64xf32>
    %cst_1 = arith.constant 6.250000e-02 : f32
    %4 = vector.broadcast %cst_1 : f32 to vector<8x64xf32>
    %5 = arith.mulf %3, %4 : vector<8x64xf32>
    %6 = arith.truncf %5 : vector<8x64xf32> to vector<8x64xbf16>
    %c0_2 = arith.constant 0 : index
    %c0_3 = arith.constant 0 : index
    %7 = vector.load %arg2[%c0_2, %c0_3] : memref<320x256xbf16, #tpu.memory_space<vmem>>, vector<64x128xbf16>
    %c64 = arith.constant 64 : index
    %c0_4 = arith.constant 0 : index
    %8 = vector.load %arg2[%c64, %c0_4] : memref<320x256xbf16, #tpu.memory_space<vmem>>, vector<128x256xbf16>
    %c192 = arith.constant 192 : index
    %c0_5 = arith.constant 0 : index
    %9 = vector.load %arg2[%c192, %c0_5] : memref<320x256xbf16, #tpu.memory_space<vmem>>, vector<128x128xbf16>
    %c0_6 = arith.constant 0 : index
    %c0_7 = arith.constant 0 : index
    %10 = vector.load %arg3[%c0_6, %c0_7] : memref<8x128xf32, #tpu.memory_space<vmem>>, vector<1x128xf32>
    %c1 = arith.constant 1 : index
    %c0_8 = arith.constant 0 : index
    %11 = vector.load %arg3[%c1, %c0_8] : memref<8x128xf32, #tpu.memory_space<vmem>>, vector<1x128xf32>
    %c2 = arith.constant 2 : index
    %c0_9 = arith.constant 0 : index
    %12 = vector.load %arg3[%c2, %c0_9] : memref<8x128xf32, #tpu.memory_space<vmem>>, vector<1x128xf32>
    %c3 = arith.constant 3 : index
    %c0_10 = arith.constant 0 : index
    %13 = vector.load %arg3[%c3, %c0_10] : memref<8x128xf32, #tpu.memory_space<vmem>>, vector<1x128xf32>
    %cst_11 = arith.constant dense<0.000000e+00> : vector<8x128xf32>
    %14 = tpu.matmul %6, %7, %cst_11 {dimension_numbers = #tpu.dot_dimension_numbers<[1], [0], [0], [1], [0, 0, 1, 1], [], []>} : vector<8x64xbf16>, vector<64x128xbf16>, vector<8x128xf32> -> vector<8x128xf32>
    %15 = vector.broadcast %10 : vector<1x128xf32> to vector<8x128xf32>
    %16 = arith.addf %14, %15 : vector<8x128xf32>
    %cst_12 = arith.constant 0.000000e+00 : f32
    %17 = vector.broadcast %cst_12 : f32 to vector<8x128xf32>
    %18 = arith.maximumf %16, %17 : vector<8x128xf32>
    %19 = arith.truncf %18 : vector<8x128xf32> to vector<8x128xbf16>
    %cst_13 = arith.constant dense<0.000000e+00> : vector<8x256xf32>
    %20 = tpu.matmul %19, %8, %cst_13 {dimension_numbers = #tpu.dot_dimension_numbers<[1], [0], [0], [1], [0, 0, 1, 1], [], []>} : vector<8x128xbf16>, vector<128x256xbf16>, vector<8x256xf32> -> vector<8x256xf32>
    %21 = vector.extract_strided_slice %20 {offsets = [0, 0], sizes = [8, 128], strides = [1, 1]} : vector<8x256xf32> to vector<8x128xf32>
    %22 = vector.broadcast %11 : vector<1x128xf32> to vector<8x128xf32>
    %23 = arith.addf %21, %22 : vector<8x128xf32>
    %24 = arith.negf %23 : vector<8x128xf32>
    %25 = math.exp %24 : vector<8x128xf32>
    %cst_14 = arith.constant 1.000000e+00 : f32
    %26 = vector.broadcast %cst_14 : f32 to vector<8x128xf32>
    %27 = arith.addf %26, %25 : vector<8x128xf32>
    %28 = arith.divf %26, %27 : vector<8x128xf32>
    %29 = vector.extract_strided_slice %20 {offsets = [0, 128], sizes = [8, 128], strides = [1, 1]} : vector<8x256xf32> to vector<8x128xf32>
    %cst_15 = arith.constant 5.000000e-01 : f32
    %30 = vector.broadcast %cst_15 : f32 to vector<8x128xf32>
    %31 = arith.mulf %30, %29 : vector<8x128xf32>
    %cst_16 = arith.constant 2.000000e+00 : f32
    %32 = math.sqrt %cst_16 : f32
    %cst_17 = arith.constant 1.000000e+00 : f32
    %33 = arith.divf %cst_17, %32 : f32
    %34 = vector.broadcast %33 : f32 to vector<8x128xf32>
    %35 = arith.mulf %29, %34 : vector<8x128xf32>
    %36 = math.erf %35 : vector<8x128xf32>
    %cst_18 = arith.constant 1.000000e+00 : f32
    %37 = vector.broadcast %cst_18 : f32 to vector<8x128xf32>
    %38 = arith.addf %37, %36 : vector<8x128xf32>
    %39 = arith.mulf %31, %38 : vector<8x128xf32>
    %40 = arith.truncf %39 : vector<8x128xf32> to vector<8x128xbf16>
    %cst_19 = arith.constant dense<0.000000e+00> : vector<8x128xf32>
    %41 = tpu.matmul %40, %9, %cst_19 {dimension_numbers = #tpu.dot_dimension_numbers<[1], [0], [0], [1], [0, 0, 1, 1], [], []>} : vector<8x128xbf16>, vector<128x128xbf16>, vector<8x128xf32> -> vector<8x128xf32>
    %42 = arith.addf %29, %41 : vector<8x128xf32>
    %cst_20 = arith.constant dense<0.000000e+00> : vector<8xf32>
    %43 = vector.multi_reduction <add>, %42, %cst_20 [1] : vector<8x128xf32> to vector<8xf32>
    %44 = vector.shape_cast %43 : vector<8xf32> to vector<8x1xf32>
    %cst_21 = arith.constant 3.125000e-02 : f32
    %45 = vector.broadcast %cst_21 : f32 to vector<8x1xf32>
    %46 = arith.mulf %44, %45 : vector<8x1xf32>
    %47 = arith.mulf %42, %42 : vector<8x128xf32>
    %cst_22 = arith.constant dense<0.000000e+00> : vector<8xf32>
    %48 = vector.multi_reduction <add>, %47, %cst_22 [1] : vector<8x128xf32> to vector<8xf32>
    %49 = vector.shape_cast %48 : vector<8xf32> to vector<8x1xf32>
    %cst_23 = arith.constant 3.125000e-02 : f32
    %50 = vector.broadcast %cst_23 : f32 to vector<8x1xf32>
    %51 = arith.mulf %49, %50 : vector<8x1xf32>
    %52 = arith.mulf %46, %46 : vector<8x1xf32>
    %53 = arith.subf %51, %52 : vector<8x1xf32>
    %54 = vector.broadcast %46 : vector<8x1xf32> to vector<8x128xf32>
    %55 = arith.subf %42, %54 : vector<8x128xf32>
    %cst_24 = arith.constant 9.99999974E-6 : f32
    %56 = vector.broadcast %cst_24 : f32 to vector<8x1xf32>
    %57 = arith.addf %53, %56 : vector<8x1xf32>
    %58 = math.rsqrt %57 : vector<8x1xf32>
    %59 = vector.broadcast %58 : vector<8x1xf32> to vector<8x128xf32>
    %60 = arith.mulf %55, %59 : vector<8x128xf32>
    %61 = vector.broadcast %12 : vector<1x128xf32> to vector<8x128xf32>
    %62 = arith.mulf %60, %61 : vector<8x128xf32>
    %63 = vector.broadcast %13 : vector<1x128xf32> to vector<8x128xf32>
    %64 = arith.addf %62, %63 : vector<8x128xf32>
    %c0_25 = arith.constant 0 : index
    %c0_26 = arith.constant 0 : index
    %65 = vector.load %arg4[%c0_25, %c0_26] : memref<8x256xf32, #tpu.memory_space<vmem>>, vector<8x128xf32>
    tpu.vector_store %arg4[%c0_25, %c0_26], %64 {strides = array<i32>} : memref<8x256xf32, #tpu.memory_space<vmem>>, vector<8x128xf32>,
    %c0_27 = arith.constant 0 : index
    %c128 = arith.constant 128 : index
    %66 = vector.load %arg4[%c0_27, %c128] : memref<8x256xf32, #tpu.memory_space<vmem>>, vector<8x128xf32>
    tpu.vector_store %arg4[%c0_27, %c128], %28 {strides = array<i32>} : memref<8x256xf32, #tpu.memory_space<vmem>>, vector<8x128xf32>,
    return
  }
  func.func @transform_0(%arg0: i32) -> (i32, i32) {
    %c0_i32 = arith.constant 0 : i32
    %c0_i32_0 = arith.constant 0 : i32
    return %arg0, %c0_i32 : i32, i32
  }
  func.func @transform_1(%arg0: i32) -> (i32, i32) {
    %c0_i32 = arith.constant 0 : i32
    %c0_i32_0 = arith.constant 0 : i32
    %c0_i32_1 = arith.constant 0 : i32
    return %c0_i32, %c0_i32_0 : i32, i32
  }
  func.func @transform_2(%arg0: i32) -> (i32, i32) {
    %c0_i32 = arith.constant 0 : i32
    %c0_i32_0 = arith.constant 0 : i32
    %c0_i32_1 = arith.constant 0 : i32
    return %c0_i32, %c0_i32_0 : i32, i32
  }
  func.func @transform_3(%arg0: i32) -> (i32, i32) {
    %c0_i32 = arith.constant 0 : i32
    %c0_i32_0 = arith.constant 0 : i32
    return %arg0, %c0_i32 : i32, i32
  }
}

</mosaic_0001>

<llo_original>
// kernel: audio_encoder_forward.1
$region0: #{audio_encoder_forward.1}
  #allocation0 [shape = 'u32[]', space=smem, size = 0x4, offset = 0x4, fixed_abs, tag = 'smem constant byte address 0x4 - core index']
  #allocation1 [shape = 'u32[72,128]{1,0:T(1,128)}', space=vmem, size = 0x9000, scoped, tag = 'internal scratch']
  %s0 = inlined_call_operand.vmem [shape: bf16[256,64], index: 0, kind: input, shape index: {}]
  %s1 = inlined_call_operand.vmem [shape: bf16[320,256], index: 1, kind: input, shape index: {}]
  %s2 = inlined_call_operand.vmem [shape: f32[8,128], index: 2, kind: input, shape index: {}]
  %s3 = inlined_call_operand.vmem [shape: f32[16,256], index: 3, kind: output, shape index: {}]
  %s4 = sld [smem:[#allocation0]]
  $region45: #{audio_encoder_forward.1} parent=0
    _
  %s6 = ssub.s32 1, %s4
  %s7 = scalar_select 0, %s6, %s4
  loop: start=0, step=1, limit=4
  $region2: #{audio_encoder_forward.1} parent=0 // loop_pre_header
    _
  $region3: #{audio_encoder_forward.1} parent=0 // loop_header
    %s9 = sphi 0, %s13
    %p10 = scmp.ge.s32.totalorder %s9, 4
    %s19 = sphi 0, %s21
    %s22 = sphi 0, %s19
    %s23 = sphi 0, %s22
    %s39 = sphi 0, %s23
    %s43 = sphi 0, %s43
    %s45 = sphi 0, %s43
    %s46 = sphi 0, %s45
    %s60 = sphi 0, %s46
    %s64 = sphi 0, %s64
    %s66 = sphi 0, %s64
    %s67 = sphi 0, %s66
    %s81 = sphi 0, %s67
    %s87 = sphi 0, %s89
    %s90 = sphi 0, %s87
    %s91 = sphi 0, %s90
    %s107 = sphi 0, %s91
  $region4: #{audio_encoder_forward.1} parent=0 // loop_header_branch
    %12 = sbr.rel (%p10) target = $region8
  $region5: #{audio_encoder_forward.1} parent=0 // loop_body
    %s14 = ssub.s32 %s9, 1
    %s15 = ssub.s32 %s9, 2
    %s16 = sadd.s32 %s9, 1
    %s17 = ssub.s32 %s9, %s16
    %p18 = scmp.eq.s32.totalorder %s17, 0
    %s20 = sadd.s32 %s19, 1
    %s21 = scalar_select %p18, %s19, %s20
    %p24 = pneg %p18
    %p25 = scmp.eq.s32.totalorder %s9, 1
    %p26 = por %p24, %p25
    %p27 = scmp.ne.s32.totalorder %s19, %s22
    %p28 = scmp.eq.s32.totalorder %s9, 0
    %p29 = por %p27, %p28
    %p30 = scmp.ne.s32.totalorder %s19, %s22
    %p31 = scmp.eq.s32.totalorder %s14, 1
    %p32 = por %p30, %p31
    %p33 = scmp.ne.s32.totalorder %s22, %s23
    %p34 = scmp.eq.s32.totalorder %s14, 0
    %p35 = por %p33, %p34
    %p36 = scmp.ne.s32.totalorder %s22, %s23
    %p37 = scmp.eq.s32.totalorder %s15, 1
    %p38 = por %p36, %p37
    %p40 = scmp.ne.s32.totalorder %s23, %s39
    %p41 = scmp.eq.s32.totalorder %s15, 0
    %p42 = por %p40, %p41
    %s44 = sadd.s32 %s43, 1
    %p47 = scmp.eq.s32.totalorder %s9, 1
    %p48 = scmp.ne.s32.totalorder %s43, %s45
    %p49 = scmp.eq.s32.totalorder %s9, 0
    %p50 = por %p48, %p49
    %p51 = scmp.ne.s32.totalorder %s43, %s45
    %p52 = scmp.eq.s32.totalorder %s14, 1
    %p53 = por %p51, %p52
    %p54 = scmp.ne.s32.totalorder %s45, %s46
    %p55 = scmp.eq.s32.totalorder %s14, 0
    %p56 = por %p54, %p55
    %p57 = scmp.ne.s32.totalorder %s45, %s46
    %p58 = scmp.eq.s32.totalorder %s15, 1
    %p59 = por %p57, %p58
    %p61 = scmp.ne.s32.totalorder %s46, %s60
    %p62 = scmp.eq.s32.totalorder %s15, 0
    %p63 = por %p61, %p62
    %s65 = sadd.s32 %s64, 1
    %p68 = scmp.eq.s32.totalorder %s9, 1
    %p69 = scmp.ne.s32.totalorder %s64, %s66
    %p70 = scmp.eq.s32.totalorder %s9, 0
    %p71 = por %p69, %p70
    %p72 = scmp.ne.s32.totalorder %s64, %s66
    %p73 = scmp.eq.s32.totalorder %s14, 1
    %p74 = por %p72, %p73
    %p75 = scmp.ne.s32.totalorder %s66, %s67
    %p76 = scmp.eq.s32.totalorder %s14, 0
    %p77 = por %p75, %p76
    %p78 = scmp.ne.s32.totalorder %s66, %s67
    %p79 = scmp.eq.s32.totalorder %s15, 1
    %p80 = por %p78, %p79
    %p82 = scmp.ne.s32.totalorder %s67, %s81
    %p83 = scmp.eq.s32.totalorder %s15, 0
    %p84 = por %p82, %p83
    %s85 = ssub.s32 %s9, %s16
    %p86 = scmp.eq.s32.totalorder %s85, 0
    %s88 = sadd.s32 %s87, 1
    %s89 = scalar_select %p86, %s87, %s88
    %p92 = pneg %p86
    %p93 = scmp.eq.s32.totalorder %s9, 1
    %p94 = por %p92, %p93
    %p95 = scmp.ne.s32.totalorder %s87, %s90
    %p96 = scmp.eq.s32.totalorder %s9, 0
    %p97 = por %p95, %p96
    %p98 = scmp.ne.s32.totalorder %s87, %s90
    %p99 = scmp.eq.s32.totalorder %s14, 1
    %p100 = por %p98, %p99
    %p101 = scmp.ne.s32.totalorder %s90, %s91
    %p102 = scmp.eq.s32.totalorder %s14, 0
    %p103 = por %p101, %p102
    %p104 = scmp.ne.s32.totalorder %s90, %s91
    %p105 = scmp.eq.s32.totalorder %s15, 1
    %p106 = por %p104, %p105
    %p108 = scmp.ne.s32.totalorder %s91, %s107
    %p109 = scmp.eq.s32.totalorder %s15, 0
    %p110 = por %p108, %p109
    %p111 = scmp.le.s32.totalorder 1, %s9
    %p112 = scmp.lt.s32.totalorder %s9, 3
    %p113 = pnand %p111, %p112
    %p114 = pneg %p113
    // Predicated region
    $region9: #{audio_encoder_forward.1} parent=5 // pred_check
      _
    $region10: #{audio_encoder_forward.1} parent=5 // pred_check_branch
      %116 = sbr.rel (%p113) target = $region12
    $region11: #{audio_encoder_forward.1} parent=5 // pred_region
      %s117 = ssub.s32 %s9, 1
      // Predicated region
      $region13: #{audio_encoder_forward.1} parent=11 // pred_check
        %p118 = pneg %p56
      $region14: #{audio_encoder_forward.1} parent=11 // pred_check_branch
        %120 = sbr.rel (%p118) target = $region16
      $region15: #{audio_encoder_forward.1} parent=11 // pred_region
        _
      $region16: #{audio_encoder_forward.1} parent=11 // pred_fallthru
        _
      // Predicated region
      $region17: #{audio_encoder_forward.1} parent=11 // pred_check
        %p121 = pneg %p77
      $region18: #{audio_encoder_forward.1} parent=11 // pred_check_branch
        %123 = sbr.rel (%p121) target = $region20
      $region19: #{audio_encoder_forward.1} parent=11 // pred_region
        _
      $region20: #{audio_encoder_forward.1} parent=11 // pred_fallthru
        _
    $region12: #{audio_encoder_forward.1} parent=5 // pred_fallthru
      _
    %p124 = scmp.lt.s32.totalorder %s9, 2
    // Predicated region
    $region21: #{audio_encoder_forward.1} parent=5 // pred_check
      %p125 = pneg %p124
    $region22: #{audio_encoder_forward.1} parent=5 // pred_check_branch
      %127 = sbr.rel (%p125) target = $region24
    $region23: #{audio_encoder_forward.1} parent=5 // pred_region
      // Predicated region
      $region25: #{audio_encoder_forward.1} parent=23 // pred_check
        %p128 = pneg %p29
      $region26: #{audio_encoder_forward.1} parent=23 // pred_check_branch
        %130 = sbr.rel (%p128) target = $region28
      $region27: #{audio_encoder_forward.1} parent=23 // pred_region
        %s131 = smul.u32 16, %s9
        %p132 = scmp.lt.s32.totalorder %s131, 31
        %s133 = scalar_select %p132, %s131, 31
        %s134 = smul.addr %s133, 4
        %s135 = scalar_lea.vmem %s0, %s134
        %s136 = smul.u32 16, %s9
      $region28: #{audio_encoder_forward.1} parent=23 // pred_fallthru
        _
    $region24: #{audio_encoder_forward.1} parent=5 // pred_fallthru
      _
    %p137 = scmp.le.s32.totalorder 1, %s9
    %p138 = scmp.lt.s32.totalorder %s9, 3
    %p139 = pnand %p137, %p138
    %p140 = pneg %p139
    // Predicated region
    $region29: #{audio_encoder_forward.1} parent=5 // pred_check
      _
    $region30: #{audio_encoder_forward.1} parent=5 // pred_check_branch
      %142 = sbr.rel (%p139) target = $region32
    $region31: #{audio_encoder_forward.1} parent=5 // pred_region
      %s143 = ssub.s32 %s9, 1
      %s144 = smul.u32 16, %s14
      %p145 = scmp.lt.s32.totalorder %s144, 31
      %s146 = scalar_select %p145, %s144, 31
      %s147 = smul.addr %s146, 4
      %s148 = scalar_lea.vmem %s0, %s147
      %p149 = pneg %p35
      %p150 = pneg %p32
      %p151 = pneg %p56
      %p152 = pneg %p53
      %p153 = pneg %p77
      %p154 = pneg %p74
      %p155 = pneg %p103
      %p156 = pneg %p100
      %p157 = scmp.lt.s32.totalorder %s14, 1
      %s158 = scalar_select %p157, %s14, 1
      %s159 = smul.addr %s158, 2
      %s160 = smul.addr %s159, 8
      %s161 = scalar_lea.vmem %s3, %s160
      %s162 = smul.u32 16, %s14
      %p163 = scmp.lt.s32.totalorder %s162, 31
      %s164 = scalar_select %p163, %s162, 31
      %s165 = smul.addr %s164, 4
      %s166 = scalar_lea.vmem %s0, %s165
      %s167 = smul.u32 16, %s14
      %p168 = scmp.lt.s32.totalorder %s14, 1
      %s169 = scalar_select %p168, %s14, 1
      %s170 = smul.addr %s169, 2
      %s171 = smul.addr %s170, 8
      %s172 = scalar_lea.vmem %s3, %s171
      %v174 = vld [vmem:[%s166] sm:$0xf]
      %v175 = vld [vmem:[%s166 + $0x4] sm:$0xf]
      %v176 = vld [vmem:[%s166 + $0x8] sm:$0xf]
      %v177 = vld [vmem:[%s166 + $0xc] sm:$0xf]
      %v178 = vld [vmem:[%s166 + $0x10] sm:$0xf]
      %v179 = vld [vmem:[%s166 + $0x14] sm:$0xf]
      %v180 = vld [vmem:[%s166 + $0x18] sm:$0xf]
      %v181 = vld [vmem:[%s166 + $0x1c] sm:$0xf]
      %v182 = vld [vmem:[%s166 + $0x20] sm:$0xf]
      %v183 = vld [vmem:[%s166 + $0x24] sm:$0xf]
      %v184 = vld [vmem:[%s166 + $0x28] sm:$0xf]
      %v185 = vld [vmem:[%s166 + $0x2c] sm:$0xf]
      %v186 = vld [vmem:[%s166 + $0x30] sm:$0xf]
      %v187 = vld [vmem:[%s166 + $0x34] sm:$0xf]
      %v188 = vld [vmem:[%s166 + $0x38] sm:$0xf]
      %v189 = vld [vmem:[%s166 + $0x3c] sm:$0xf]
      %v190 = vunpack.c.l.bf16 %v174
      %v191 = vunpack.c.l.bf16 %v175
      %v192 = vunpack.c.l.bf16 %v176
      %v193 = vunpack.c.l.bf16 %v177
      %v194 = vunpack.c.l.bf16 %v178
      %v195 = vunpack.c.l.bf16 %v179
      %v196 = vunpack.c.l.bf16 %v180
      %v197 = vunpack.c.l.bf16 %v181
      %v198 = vunpack.c.l.bf16 %v182
      %v199 = vunpack.c.l.bf16 %v183
      %v200 = vunpack.c.l.bf16 %v184
      %v201 = vunpack.c.l.bf16 %v185
      %v202 = vunpack.c.l.bf16 %v186
      %v203 = vunpack.c.l.bf16 %v187
      %v204 = vunpack.c.l.bf16 %v188
      %v205 = vunpack.c.l.bf16 %v189
      %vm206 = vcmask 523264
      %v207 = vsel %vm206, %v190, 0.0
      %v208 = vsel %vm206, %v191, 0.0
      %v209 = vadd.f32 %v207, %v208
      %v210 = vrot.slane %v209, 4
      %v211 = vadd.f32 %v209, %v210
      %v212 = vrot.slane %v211, 2
      %v213 = vadd.f32 %v211, %v212
      %v214 = vrot.slane %v213, 1
      %v215 = vadd.f32 %v213, %v214
      %v216 = vsel %vm206, %v192, 0.0
      %v217 = vsel %vm206, %v193, 0.0
      %v218 = vadd.f32 %v216, %v217
      %v219 = vrot.slane %v218, 4
      %v220 = vadd.f32 %v218, %v219
      %v221 = vrot.slane %v220, 2
      %v222 = vadd.f32 %v220, %v221
      %v223 = vrot.slane %v222, 1
      %v224 = vadd.f32 %v222, %v223
      %v225 = vsel %vm206, %v194, 0.0
      %v226 = vsel %vm206, %v195, 0.0
      %v227 = vadd.f32 %v225, %v226
      %v228 = vrot.slane %v227, 4
      %v229 = vadd.f32 %v227, %v228
      %v230 = vrot.slane %v229, 2
      %v231 = vadd.f32 %v229, %v230
      %v232 = vrot.slane %v231, 1
      %v233 = vadd.f32 %v231, %v232
      %v234 = vsel %vm206, %v196, 0.0
      %v235 = vsel %vm206, %v197, 0.0
      %v236 = vadd.f32 %v234, %v235
      %v237 = vrot.slane %v236, 4
      %v238 = vadd.f32 %v236, %v237
      %v239 = vrot.slane %v238, 2
      %v240 = vadd.f32 %v238, %v239
      %v241 = vrot.slane %v240, 1
      %v242 = vadd.f32 %v240, %v241
      %v243 = vsel %vm206, %v198, 0.0
      %v244 = vsel %vm206, %v199, 0.0
      %v245 = vadd.f32 %v243, %v244
      %v246 = vrot.slane %v245, 4
      %v247 = vadd.f32 %v245, %v246
      %v248 = vrot.slane %v247, 2
      %v249 = vadd.f32 %v247, %v248
      %v250 = vrot.slane %v249, 1
      %v251 = vadd.f32 %v249, %v250
      %v252 = vsel %vm206, %v200, 0.0
      %v253 = vsel %vm206, %v201, 0.0
      %v254 = vadd.f32 %v252, %v253
      %v255 = vrot.slane %v254, 4
      %v256 = vadd.f32 %v254, %v255
      %v257 = vrot.slane %v256, 2
      %v258 = vadd.f32 %v256, %v257
      %v259 = vrot.slane %v258, 1
      %v260 = vadd.f32 %v258, %v259
      %v261 = vsel %vm206, %v202, 0.0
      %v262 = vsel %vm206, %v203, 0.0
      %v263 = vadd.f32 %v261, %v262
      %v264 = vrot.slane %v263, 4
      %v265 = vadd.f32 %v263, %v264
      %v266 = vrot.slane %v265, 2
      %v267 = vadd.f32 %v265, %v266
      %v268 = vrot.slane %v267, 1
      %v269 = vadd.f32 %v267, %v268
      %v270 = vsel %vm206, %v204, 0.0
      %v271 = vsel %vm206, %v205, 0.0
      %v272 = vadd.f32 %v270, %v271
      %v273 = vrot.slane %v272, 4
      %v274 = vadd.f32 %v272, %v273
      %v275 = vrot.slane %v274, 2
      %v276 = vadd.f32 %v274, %v275
      %v277 = vrot.slane %v276, 1
      %v278 = vadd.f32 %v276, %v277
      %v279 = vmul.f32 %v215, 0.0625
      %v280 = vmul.f32 %v224, 0.0625
      %v281 = vmul.f32 %v233, 0.0625
      %v282 = vmul.f32 %v242, 0.0625
      %v283 = vmul.f32 %v251, 0.0625
      %v284 = vmul.f32 %v260, 0.0625
      %v285 = vmul.f32 %v269, 0.0625
      %v286 = vmul.f32 %v278, 0.0625
      %v287 = vpack.c.bf16 %v279, %v279
      %v288 = vpack.c.bf16 %v280, %v280
      %v289 = vpack.c.bf16 %v281, %v281
      %v290 = vpack.c.bf16 %v282, %v282
      %v291 = vpack.c.bf16 %v283, %v283
      %v292 = vpack.c.bf16 %v284, %v284
      %v293 = vpack.c.bf16 %v285, %v285
      %v294 = vpack.c.bf16 %v286, %v286
      %v295 = vld [vmem:[%s1] sm:$0xf]
      %v296 = vld [vmem:[%s1 + $0x8] sm:$0xf]
      %v297 = vld [vmem:[%s1 + $0x10] sm:$0xf]
      %v298 = vld [vmem:[%s1 + $0x18] sm:$0xf]
      %v299 = vld [vmem:[%s1 + $0x20] sm:$0xf]
      %v300 = vld [vmem:[%s1 + $0x28] sm:$0xf]
      %v301 = vld [vmem:[%s1 + $0x30] sm:$0xf]
      %v302 = vld [vmem:[%s1 + $0x38] sm:$0xf]
      %v303 = vld [vmem:[%s1 + $0x40] sm:$0xff]
      %v304 = vld [vmem:[%s1 + $0x48] sm:$0xff]
      %v305 = vld [vmem:[%s1 + $0x50] sm:$0xff]
      %v306 = vld [vmem:[%s1 + $0x58] sm:$0xff]
      %v307 = vld [vmem:[%s1 + $0x60] sm:$0xff]
      %v308 = vld [vmem:[%s1 + $0x68] sm:$0xff]
      %v309 = vld [vmem:[%s1 + $0x70] sm:$0xff]
      %v310 = vld [vmem:[%s1 + $0x78] sm:$0xff]
      %v311 = vld [vmem:[%s1 + $0x80] sm:$0xff]
      %v312 = vld [vmem:[%s1 + $0x88] sm:$0xff]
      %v313 = vld [vmem:[%s1 + $0x90] sm:$0xff]
      %v314 = vld [vmem:[%s1 + $0x98] sm:$0xff]
      %v315 = vld [vmem:[%s1 + $0xa0] sm:$0xff]
      %v316 = vld [vmem:[%s1 + $0xa8] sm:$0xff]
      %v317 = vld [vmem:[%s1 + $0xb0] sm:$0xff]
      %v318 = vld [vmem:[%s1 + $0xb8] sm:$0xff]
      %v319 = vld [vmem:[%s1 + $0xc0] sm:$0xf]
      %v320 = vld [vmem:[%s1 + $0xc8] sm:$0xf]
      %v321 = vld [vmem:[%s1 + $0xd0] sm:$0xf]
      %v322 = vld [vmem:[%s1 + $0xd8] sm:$0xf]
      %v323 = vld [vmem:[%s1 + $0xe0] sm:$0xf]
      %v324 = vld [vmem:[%s1 + $0xe8] sm:$0xf]
      %v325 = vld [vmem:[%s1 + $0xf0] sm:$0xf]
      %v326 = vld [vmem:[%s1 + $0xf8] sm:$0xf]
      %v327 = vld [vmem:[%s1 + $0x100] sm:$0xf]
      %v328 = vld [vmem:[%s1 + $0x108] sm:$0xf]
      %v329 = vld [vmem:[%s1 + $0x110] sm:$0xf]
      %v330 = vld [vmem:[%s1 + $0x118] sm:$0xf]
      %v331 = vld [vmem:[%s1 + $0x120] sm:$0xf]
      %v332 = vld [vmem:[%s1 + $0x128] sm:$0xf]
      %v333 = vld [vmem:[%s1 + $0x130] sm:$0xf]
      %v334 = vld [vmem:[%s1 + $0x138] sm:$0xf]
      %v335 = vld [vmem:[%s2] sm:$0x1]
      %v336 = vld [vmem:[%s2 + $0x1] sm:$0x1]
      %v337 = vld [vmem:[%s2 + $0x2] sm:$0x1]
      %v338 = vld [vmem:[%s2 + $0x3] sm:$0x1]
      %v339 = vperm.slane %v335, 0
      %v348 = vunpack.c.l.b16 %v287
      %v349 = vunpack.c.l.b16 %v288
      %v350 = vunpack.c.l.b16 %v289
      %v351 = vunpack.c.l.b16 %v290
      %v352 = vunpack.c.l.b16 %v291
      %v353 = vunpack.c.l.b16 %v292
      %v354 = vunpack.c.l.b16 %v293
      %v355 = vunpack.c.l.b16 %v294
      %vm356 = vcmask 1041409
      %v357 = vsel %vm356, %v349, %v348
      %vm358 = vcmask 1042434
      %v359 = vsel %vm358, %v350, %v357
      %vm360 = vcmask 1043459
      %v361 = vsel %vm360, %v351, %v359
      %vm362 = vcmask 1044484
      %v363 = vsel %vm362, %v352, %v361
      %vm364 = vcmask 1045509
      %v365 = vsel %vm364, %v353, %v363
      %vm366 = vcmask 1046534
      %v367 = vsel %vm366, %v354, %v365
      %vm368 = vcmask 1047559
      %v369 = vsel %vm368, %v355, %v367
      %v370 = vpack.c.b16 %v369, %v369
      %v379 = vunpack.c.l.b16 %v295
      %v380 = vunpack.c.l.b16 %v296
      %v381 = vunpack.c.l.b16 %v297
      %v382 = vunpack.c.l.b16 %v298
      %v383 = vunpack.c.l.b16 %v299
      %v384 = vunpack.c.l.b16 %v300
      %v385 = vunpack.c.l.b16 %v301
      %v386 = vunpack.c.l.b16 %v302
      %v387 = vpack.c.b16 %v380, %v379
      %v388 = vpack.c.b16 %v382, %v381
      %v389 = vpack.c.b16 %v384, %v383
      %v390 = vpack.c.b16 %v386, %v385
      %v396 = vsel %vm206, %v370, 0
      %398 = vmatpush.bf16.msra.mxu0 0
      %399 = vmatpush.bf16.msra.mxu0 0
      %400 = vmatpush.bf16.msra.mxu0 0
      %401 = vmatpush.bf16.msra.mxu0 0
      %402 = vmatpush.bf16.msra.mxu0 %v390
      %403 = vmatpush.bf16.msra.mxu0 %v389
      %404 = vmatpush.bf16.msra.mxu0 %v388
      %405 = vmatpush.bf16.msra.mxu0 %v387
      %406 = vmatmul.bf16.gmra.mxu0 %v396
      %v407 = vpop.f32.mrf.mxu0
      %v408 = vadd.f32 %v339, %v407
      %v409 = vpop.f32.mrf.mxu0
      %410 = vdwg.mxu0
      %v411 = vmax.f32 %v408, 0.0
      %v412 = vpack.c.bf16 %v411, %v411
      %v429 = vunpack.c.l.b16 %v303
      %v430 = vunpack.c.h.b16 %v303
      %v431 = vunpack.c.l.b16 %v304
      %v432 = vunpack.c.h.b16 %v304
      %v433 = vunpack.c.l.b16 %v305
      %v434 = vunpack.c.h.b16 %v305
      %v435 = vunpack.c.l.b16 %v306
      %v436 = vunpack.c.h.b16 %v306
      %v437 = vunpack.c.l.b16 %v307
      %v438 = vunpack.c.h.b16 %v307
      %v439 = vunpack.c.l.b16 %v308
      %v440 = vunpack.c.h.b16 %v308
      %v441 = vunpack.c.l.b16 %v309
      %v442 = vunpack.c.h.b16 %v309
      %v443 = vunpack.c.l.b16 %v310
      %v444 = vunpack.c.h.b16 %v310
      %v445 = vunpack.c.l.b16 %v311
      %v446 = vunpack.c.h.b16 %v311
      %v447 = vunpack.c.l.b16 %v312
      %v448 = vunpack.c.h.b16 %v312
      %v449 = vunpack.c.l.b16 %v313
      %v450 = vunpack.c.h.b16 %v313
      %v451 = vunpack.c.l.b16 %v314
      %v452 = vunpack.c.h.b16 %v314
      %v453 = vunpack.c.l.b16 %v315
      %v454 = vunpack.c.h.b16 %v315
      %v455 = vunpack.c.l.b16 %v316
      %v456 = vunpack.c.h.b16 %v316
      %v457 = vunpack.c.l.b16 %v317
      %v458 = vunpack.c.h.b16 %v317
      %v459 = vunpack.c.l.b16 %v318
      %v460 = vunpack.c.h.b16 %v318
      %v461 = vpack.c.b16 %v431, %v429
      %v462 = vpack.c.b16 %v432, %v430
      %v463 = vpack.c.b16 %v435, %v433
      %v464 = vpack.c.b16 %v436, %v434
      %v465 = vpack.c.b16 %v439, %v437
      %v466 = vpack.c.b16 %v440, %v438
      %v467 = vpack.c.b16 %v443, %v441
      %v468 = vpack.c.b16 %v444, %v442
      %v469 = vpack.c.b16 %v447, %v445
      %v470 = vpack.c.b16 %v448, %v446
      %v471 = vpack.c.b16 %v451, %v449
      %v472 = vpack.c.b16 %v452, %v450
      %v473 = vpack.c.b16 %v455, %v453
      %v474 = vpack.c.b16 %v456, %v454
      %v475 = vpack.c.b16 %v459, %v457
      %v476 = vpack.c.b16 %v460, %v458
      %493 = vmatpush.bf16.msra.mxu0 %v475
      %494 = vmatpush.bf16.msra.mxu0 %v473
      %495 = vmatpush.bf16.msra.mxu0 %v471
      %496 = vmatpush.bf16.msra.mxu0 %v469
      %497 = vmatpush.bf16.msra.mxu0 %v467
      %498 = vmatpush.bf16.msra.mxu0 %v465
      %499 = vmatpush.bf16.msra.mxu0 %v463
      %500 = vmatpush.bf16.msra.mxu0 %v461
      %501 = vmatmul.bf16.gmra.mxu0 %v412
      %v502 = vpop.f32.mrf.mxu0
      %v503 = vadd.f32 0.0, %v502
      %v504 = vpop.f32.mrf.mxu0
      %505 = vdwg.mxu0
      %506 = vmatpush.bf16.msra.mxu0 %v476
      %507 = vmatpush.bf16.msra.mxu0 %v474
      %508 = vmatpush.bf16.msra.mxu0 %v472
      %509 = vmatpush.bf16.msra.mxu0 %v470
      %510 = vmatpush.bf16.msra.mxu0 %v468
      %511 = vmatpush.bf16.msra.mxu0 %v466
      %512 = vmatpush.bf16.msra.mxu0 %v464
      %513 = vmatpush.bf16.msra.mxu0 %v462
      %514 = vmatmul.bf16.gmra.mxu0 %v412
      %v515 = vpop.f32.mrf.mxu0
      %v516 = vadd.f32 0.0, %v515
      %v517 = vpop.f32.mrf.mxu0
      %518 = vdwg.mxu0
      %v519 = vperm.slane %v336, 0
      %v520 = vadd.f32 %v503, %v519
      %v521 = vxor.u32 %v520, 2147483648
      %v522 = vmul.f32 %v521, 1.442695
      %v523 = vpow.pop %v522
      %v524 = vadd.f32 %v523, 1.0
      %v525 = vrcp.pop %v524
      %v526 = vmul.f32 %v524, %v525
      %v527 = vsub.f32 1.0, %v526
      %v528 = vmul.f32 %v525, %v527
      %v529 = vadd.f32 %v525, %v528
      %vm530 = vweird.f32 %v524
      %vm531 = vweird.f32 %v525
      %vm532 = vmor %vm530, %vm531
      %v533 = vsel %vm532, %v525, %v529
      %v534 = vand.u32 2147483647, %v524
      %vm535 = vcmp.eq.f32.partialorder %v534, 8.507059e+37
      %v536 = vand.u32 %v524, 2147483648
      %v537 = vor.u32 1.1754944e-38, %v536
      %v538 = vsel %vm535, %v537, %v533
      %v539 = vmul.f32 1.0, %v538
      %v540 = vmul.f32 %v516, 0.5
      %v541 = vmul.f32 %v516, 0.70710677
      %v542 = vmul.f32 %v541, %v541
      %v543 = vmin.f32 16.0, %v542
      %v544 = vmul.f32 %v543, 2.1237322e-06
      %v545 = vadd.f32 %v544, 0.00028619796
      %v546 = vmul.f32 %v543, %v545
      %v547 = vadd.f32 %v546, 0.0036580483
      %v548 = vmul.f32 %v543, %v547
      %v549 = vadd.f32 %v548, 0.05243302
      %v550 = vmul.f32 %v543, %v549
      %v551 = vadd.f32 %v550, 0.18741608
      %v552 = vmul.f32 %v543, %v551
      %v553 = vadd.f32 %v552, 1.1283791
      %v554 = vmul.f32 %v541, %v553
      %v555 = vmul.f32 %v543, 3.8918573e-05
      %v556 = vadd.f32 %v555, 0.001143296
      %v557 = vmul.f32 %v543, %v556
      %v558 = vadd.f32 %v557, 0.014752088
      %v559 = vmul.f32 %v543, %v558
      %v560 = vadd.f32 %v559, 0.112945676
      %v561 = vmul.f32 %v543, %v560
      %v562 = vadd.f32 %v561, 0.4994258
      %v563 = vmul.f32 %v543, %v562
      %v564 = vadd.f32 %v563, 1.0
      %v565 = vrcp.pop %v564
      %v566 = vmul.f32 %v564, %v565
      %v567 = vsub.f32 1.0, %v566
      %v568 = vmul.f32 %v565, %v567
      %v569 = vadd.f32 %v565, %v568
      %vm570 = vweird.f32 %v564
      %vm571 = vweird.f32 %v565
      %vm572 = vmor %vm570, %vm571
      %v573 = vsel %vm572, %v565, %v569
      %v574 = vand.u32 2147483647, %v564
      %vm575 = vcmp.eq.f32.partialorder %v574, 8.507059e+37
      %v576 = vand.u32 %v564, 2147483648
      %v577 = vor.u32 1.1754944e-38, %v576
      %v578 = vsel %vm575, %v577, %v573
      %v579 = vmul.f32 %v554, %v578
      %v580 = vmin.f32 %v579, 1.0
      %v581 = vmax.f32 %v580, -1.0
      %v582 = vadd.f32 %v581, 1.0
      %v583 = vmul.f32 %v540, %v582
      %v584 = vpack.c.bf16 %v583, %v583
      %v601 = vunpack.c.l.b16 %v319
      %v602 = vunpack.c.l.b16 %v320
      %v603 = vunpack.c.l.b16 %v321
      %v604 = vunpack.c.l.b16 %v322
      %v605 = vunpack.c.l.b16 %v323
      %v606 = vunpack.c.l.b16 %v324
      %v607 = vunpack.c.l.b16 %v325
      %v608 = vunpack.c.l.b16 %v326
      %v609 = vunpack.c.l.b16 %v327
      %v610 = vunpack.c.l.b16 %v328
      %v611 = vunpack.c.l.b16 %v329
      %v612 = vunpack.c.l.b16 %v330
      %v613 = vunpack.c.l.b16 %v331
      %v614 = vunpack.c.l.b16 %v332
      %v615 = vunpack.c.l.b16 %v333
      %v616 = vunpack.c.l.b16 %v334
      %v617 = vpack.c.b16 %v602, %v601
      %v618 = vpack.c.b16 %v604, %v603
      %v619 = vpack.c.b16 %v606, %v605
      %v620 = vpack.c.b16 %v608, %v607
      %v621 = vpack.c.b16 %v610, %v609
      %v622 = vpack.c.b16 %v612, %v611
      %v623 = vpack.c.b16 %v614, %v613
      %v624 = vpack.c.b16 %v616, %v615
      %633 = vmatpush.bf16.msra.mxu0 %v624
      %634 = vmatpush.bf16.msra.mxu0 %v623
      %635 = vmatpush.bf16.msra.mxu0 %v622
      %636 = vmatpush.bf16.msra.mxu0 %v621
      %637 = vmatpush.bf16.msra.mxu0 %v620
      %638 = vmatpush.bf16.msra.mxu0 %v619
      %639 = vmatpush.bf16.msra.mxu0 %v618
      %640 = vmatpush.bf16.msra.mxu0 %v617
      %641 = vmatmul.bf16.gmra.mxu0 %v584
      %v642 = vpop.f32.mrf.mxu0
      %v643 = vadd.f32 0.0, %v642
      %v644 = vpop.f32.mrf.mxu0
      %645 = vdwg.mxu0
      %v646 = vadd.f32 %v516, %v643
      %647 = vadd.xlane.f32.xlu0 %v646
      %v648 = vpop.xlane.xlu0 %647
      %v649 = vmul.f32 %v648, 0.03125
      %v650 = vmul.f32 %v646, %v646
      %651 = vadd.xlane.f32.xlu0 %v650
      %v652 = vpop.xlane.xlu0 %651
      %v653 = vmul.f32 %v652, 0.03125
      %v654 = vmul.f32 %v649, %v649
      %v655 = vsub.f32 %v653, %v654
      %v656 = vsub.f32 %v646, %v649
      %v657 = vadd.f32 %v655, 1e-05
      %v658 = vrsqrt.pop %v657
      %v659 = vmul.f32 %v658, %v657
      %v660 = vmul.f32 %v659, %v658
      %v661 = vmul.f32 0.5, %v660
      %v662 = vsub.f32 1.5, %v661
      %v663 = vmul.f32 %v658, %v662
      %vm664 = vweird.f32 %v657
      %vm665 = vweird.f32 %v658
      %vm666 = vmor %vm664, %vm665
      %v667 = vsel %vm666, %v658, %v663
      %v668 = vmul.f32 %v656, %v667
      %v669 = vperm.slane %v337, 0
      %v670 = vmul.f32 %v668, %v669
      %v671 = vperm.slane %v338, 0
      %v672 = vadd.f32 %v670, %v671
      %673 = vst [vmem:[%s172] sm:$0xff] %v672
      %674 = vst [vmem:[%s172 + $0x8] sm:$0xff] %v539
      %p675 = scmp.lt.s32.totalorder %s14, 1
      %s676 = scalar_select %p675, %s14, 1
      %s677 = smul.addr %s676, 2
      %s678 = smul.addr %s677, 8
      %s679 = scalar_lea.vmem %s3, %s678
      // Predicated region
      $region33: #{audio_encoder_forward.1} parent=31 // pred_check
        %p680 = pneg %p100
      $region34: #{audio_encoder_forward.1} parent=31 // pred_check_branch
        %682 = sbr.rel (%p680) target = $region36
      $region35: #{audio_encoder_forward.1} parent=31 // pred_region
        _
      $region36: #{audio_encoder_forward.1} parent=31 // pred_fallthru
        _
    $region32: #{audio_encoder_forward.1} parent=5 // pred_fallthru
      _
    %p683 = scmp.le.s32.totalorder 2, %s9
    // Predicated region
    $region37: #{audio_encoder_forward.1} parent=5 // pred_check
      %p684 = pneg %p683
    $region38: #{audio_encoder_forward.1} parent=5 // pred_check_branch
      %686 = sbr.rel (%p684) target = $region40
    $region39: #{audio_encoder_forward.1} parent=5 // pred_region
      %s687 = ssub.s32 %s9, 2
      // Predicated region
      $region41: #{audio_encoder_forward.1} parent=39 // pred_check
        %p688 = pneg %p106
      $region42: #{audio_encoder_forward.1} parent=39 // pred_check_branch
        %690 = sbr.rel (%p688) target = $region44
      $region43: #{audio_encoder_forward.1} parent=39 // pred_region
        %p691 = scmp.lt.s32.totalorder %s15, 1
        %s692 = scalar_select %p691, %s15, 1
        %s693 = smul.addr %s692, 2
        %s694 = smul.addr %s693, 8
        %s695 = scalar_lea.vmem %s3, %s694
      $region44: #{audio_encoder_forward.1} parent=39 // pred_fallthru
        _
    $region40: #{audio_encoder_forward.1} parent=5 // pred_fallthru
      _
  $region6: #{audio_encoder_forward.1} parent=0 // loop_footer
    %s13 = sadd.s32 1, %s9
  $region7: #{audio_encoder_forward.1} parent=0 // loop_footer_branch
    %8 = sbr.rel target = $region3
  $region8: #{audio_encoder_forward.1} parent=0 // loop_exit
    _

</llo_original>
